<compile_context>
chip_gen: v7x
topology: tpu7x:2x2x1
jax: 0.10.0
libtpu: 0.0.40
codegen_flags: <defaults>
</compile_context>

<pallas_src>
import functools

import jax
import jax.numpy as jnp
from jax.experimental import pallas as pl
from jax.experimental.pallas import tpu as pltpu


def _round_up(x, m):
    return ((x + m - 1) // m) * m


def _cdiv(a, b):
    return (a + b - 1) // b


def mlp_kernel(x_ref, w1_ref, w2_ref, w3_ref, b_ref, o_ref, *, hid_pad, out_pad):
    # x_ref: [TM, IN] f32 -> cast to bf16 here.  w*: bf16, lane-dense padded.
    # b_ref: [3, BW] f32 fused biases (rows b1, b2, b3); slices are 128-multiples
    # so every load/store below is a full-lane, unmasked access.
    x = x_ref[...].astype(jnp.bfloat16)

    # Layer 1: x @ W1 + b1, ReLU (f32 accumulate on the MXU).
    h1 = jnp.dot(x, w1_ref[...], preferred_element_type=jnp.float32)
    h1 = jnp.maximum(h1 + b_ref[0:1, 0:hid_pad], 0.0).astype(jnp.bfloat16)

    # Layer 2: h1 @ W2 + b2, ReLU.
    h2 = jnp.dot(h1, w2_ref[...], preferred_element_type=jnp.float32)
    h2 = jnp.maximum(h2 + b_ref[1:2, 0:hid_pad], 0.0).astype(jnp.bfloat16)

    # Layer 3: h2 @ W3 + b3 (no activation); lane-dense [TM, out_pad] store.
    out = jnp.dot(h2, w3_ref[...], preferred_element_type=jnp.float32)
    o_ref[...] = (out + b_ref[2:3, 0:out_pad]).astype(o_ref.dtype)


def prepare_params(params):
    """One-time parameter prep (do NOT re-run per forward call).

    Casts weights to bf16, zero-pads hidden/class dims to lane-dense widths and
    fuses the three bias vectors into a single [3, BW] f32 operand (one DMA).
    Zero padding is exact: padded columns stay 0 through ReLU and matmul.
    """
    w1, b1 = params["w1"], params["b1"]
    w2, b2 = params["w2"], params["b2"]
    w3, b3 = params["w3"], params["b3"]

    input_size, hidden = w1.shape
    num_classes = w3.shape[1]

    # 128 is enough for v5e's 128-wide MXU; use 256-multiples on larger hiddens
    # to fill the v6e/v7x 256-wide systolic array per push.
    hid_pad = 128 if hidden <= 128 else _round_up(hidden, 256)
    out_pad = _round_up(num_classes, 128)

    w1_b = jnp.zeros((input_size, hid_pad), jnp.bfloat16)
    w1_b = w1_b.at[:, :hidden].set(w1.astype(jnp.bfloat16))
    w2_b = jnp.zeros((hid_pad, hid_pad), jnp.bfloat16)
    w2_b = w2_b.at[:hidden, :hidden].set(w2.astype(jnp.bfloat16))
    w3_b = jnp.zeros((hid_pad, out_pad), jnp.bfloat16)
    w3_b = w3_b.at[:hidden, :num_classes].set(w3.astype(jnp.bfloat16))

    bw = max(hid_pad, out_pad)
    b_all = jnp.zeros((3, bw), jnp.float32)
    b_all = b_all.at[0, :hidden].set(b1.reshape(-1))
    b_all = b_all.at[1, :hidden].set(b2.reshape(-1))
    b_all = b_all.at[2, :num_classes].set(b3.reshape(-1))

    return {
        "w1": w1_b, "w2": w2_b, "w3": w3_b, "b": b_all,
        "num_classes": num_classes, "hid_pad": hid_pad, "out_pad": out_pad,
    }


def _choose_tm(batch, tm_max):
    """Batch tile: multiple of 8, no tile-multiple padding of the batch.

    Small batches are split into two tiles so both v7x TensorCores get work
    under dimension_semantics=("parallel",); large batches use tm_max tiles
    (big tiles amortize the ~0.35us per-grid-step overhead).
    """
    b8 = _round_up(batch, 8)
    if b8 <= 8:
        return 8
    if b8 <= 2 * tm_max:
        return _round_up(_cdiv(b8, 2), 8)
    return tm_max


def bot_model_forward(x, prep, *, tm_max=512):
    """x: [B, input_size] float32. prep: output of prepare_params()."""
    B, input_size = x.shape
    hid_pad = prep["hid_pad"]
    out_pad = prep["out_pad"]
    num_classes = prep["num_classes"]
    w1_b, w2_b, w3_b, b_all = prep["w1"], prep["w2"], prep["w3"], prep["b"]

    tm = _choose_tm(B, tm_max)
    n_tiles = _cdiv(B, tm)  # partial last tile handled by Pallas (masked store)

    kernel = functools.partial(mlp_kernel, hid_pad=hid_pad, out_pad=out_pad)

    # VMEM budget: resident weights/biases counted double-buffered (Pallas keeps
    # two buffers even with constant index_maps) + double-buffered x / out tiles,
    # with headroom, capped at 48 MiB (leave Mosaic scratch room on v7x's 64 MiB).
    resident = ((w1_b.size + w2_b.size + w3_b.size) * 2 + b_all.size * 4) * 2
    per_tile = (tm * input_size * 4 + tm * out_pad * 4) * 2
    vmem_bytes = min(max(int(1.3 * (resident + per_tile)) + (2 << 20), 16 << 20),
                     48 << 20)

    out = pl.pallas_call(
        kernel,
        out_shape=jax.ShapeDtypeStruct((B, out_pad), jnp.float32),
        grid=(n_tiles,),
        in_specs=[
            pl.BlockSpec((tm, input_size), lambda i: (i, 0)),   # pipelined x tiles
            pl.BlockSpec(w1_b.shape, lambda i: (0, 0)),         # VMEM-resident weights
            pl.BlockSpec(w2_b.shape, lambda i: (0, 0)),
            pl.BlockSpec(w3_b.shape, lambda i: (0, 0)),
            pl.BlockSpec(b_all.shape, lambda i: (0, 0)),        # fused biases
        ],
        out_specs=pl.BlockSpec((tm, out_pad), lambda i: (i, 0)),
        compiler_params=pltpu.CompilerParams(
            dimension_semantics=("parallel",),   # megacore sharding on v7x
            vmem_limit_bytes=vmem_bytes,
        ),
    )(x, w1_b, w2_b, w3_b, b_all)

    return out[:, :num_classes]


def init_params(key, input_size, hidden_size, num_classes):
    """Deterministic init mirroring nn.Linear shapes (weights stored as [in, out])."""
    ks = jax.random.split(key, 6)

    def linear(kw, kb, fan_in, fan_out):
        bound = 1.0 / jnp.sqrt(fan_in)
        w = jax.random.uniform(kw, (fan_in, fan_out), jnp.float32, -bound, bound)
        b = jax.random.uniform(kb, (1, fan_out), jnp.float32, -bound, bound)
        return w, b

    w1, b1 = linear(ks[0], ks[1], input_size, hidden_size)
    w2, b2 = linear(ks[2], ks[3], hidden_size, hidden_size)
    w3, b3 = linear(ks[4], ks[5], hidden_size, num_classes)
    return {"w1": w1, "b1": b1, "w2": w2, "b2": b2, "w3": w3, "b3": b3}


def reference_forward(x, p):
    """Pure-JAX reference emulating the kernel's bf16 activation/weight path."""
    hp = jax.lax.Precision.HIGHEST
    f32 = lambda a: a.astype(jnp.bfloat16).astype(jnp.float32)
    h = jnp.maximum(jnp.dot(f32(x), f32(p["w1"]), precision=hp) + p["b1"], 0.0)
    h = jnp.maximum(jnp.dot(f32(h), f32(p["w2"]), precision=hp) + p["b2"], 0.0)
    return jnp.dot(f32(h), f32(p["w3"]), precision=hp) + p["b3"]


if __name__ == "__main__":
    key = jax.random.PRNGKey(0)
    k_x, k_p = jax.random.split(key)

    # Batch chosen so the grid has 2 nearly-full tiles (tm=136, no big pad waste).
    batch, input_size, hidden_size, num_classes = 260, 16, 32, 8

    x = jax.random.normal(k_x, (batch, input_size), jnp.float32)
    params = init_params(k_p, input_size, hidden_size, num_classes)
    prep = prepare_params(params)          # one-time: bf16 cast / pad / bias fuse

    out = bot_model_forward(x, prep)
    out = jax.block_until_ready(out)

    ref = reference_forward(x, params)
    assert out.shape == (batch, num_classes)
    assert jnp.allclose(out, ref, atol=1e-2, rtol=1e-2), "mismatch vs reference"

    print("KERNEL_OK")
</pallas_src>

<mosaic_0001>
module attributes {stable_mosaic.version = 11 : i64} {
  func.func @mlp_kernel(%arg0: i32, %arg1: memref<136x16xf32, #tpu.memory_space<vmem>>, %arg2: memref<16x128xbf16, #tpu.memory_space<vmem>>, %arg3: memref<128x128xbf16, #tpu.memory_space<vmem>>, %arg4: memref<128x128xbf16, #tpu.memory_space<vmem>>, %arg5: memref<3x128xf32, #tpu.memory_space<vmem>>, %arg6: memref<136x128xf32, #tpu.memory_space<vmem>>) attributes {dimension_semantics = [#tpu.dimension_semantics<parallel>], iteration_bounds = array<i64: 2>, scalar_prefetch = 0 : i64, scratch_operands = 0 : i64, tpu.core_type = #tpu.core_type<tc>, window_params = [{transform_indices = @transform_0, window_bounds = array<i64: 136, 16>}, {pipeline_mode = #tpu.pipeline_mode<synchronous>, transform_indices = @transform_1, window_bounds = array<i64: 16, 128>}, {pipeline_mode = #tpu.pipeline_mode<synchronous>, transform_indices = @transform_2, window_bounds = array<i64: 128, 128>}, {pipeline_mode = #tpu.pipeline_mode<synchronous>, transform_indices = @transform_3, window_bounds = array<i64: 128, 128>}, {pipeline_mode = #tpu.pipeline_mode<synchronous>, transform_indices = @transform_4, window_bounds = array<i64: 3, 128>}, {transform_indices = @transform_5, window_bounds = array<i64: 136, 128>}]} {
    %c0 = arith.constant 0 : index
    %c0_0 = arith.constant 0 : index
    %0 = vector.load %arg1[%c0, %c0_0] : memref<136x16xf32, #tpu.memory_space<vmem>>, vector<136x16xf32>
    %1 = arith.truncf %0 : vector<136x16xf32> to vector<136x16xbf16>
    %c0_1 = arith.constant 0 : index
    %c0_2 = arith.constant 0 : index
    %2 = vector.load %arg2[%c0_1, %c0_2] : memref<16x128xbf16, #tpu.memory_space<vmem>>, vector<16x128xbf16>
    %cst = arith.constant dense<0.000000e+00> : vector<136x128xf32>
    %3 = tpu.matmul %1, %2, %cst {dimension_numbers = #tpu.dot_dimension_numbers<[1], [0], [0], [1], [0, 0, 1, 1], [], []>} : vector<136x16xbf16>, vector<16x128xbf16>, vector<136x128xf32> -> vector<136x128xf32>
    %c0_3 = arith.constant 0 : index
    %c0_4 = arith.constant 0 : index
    %4 = vector.load %arg5[%c0_3, %c0_4] : memref<3x128xf32, #tpu.memory_space<vmem>>, vector<1x128xf32>
    %5 = vector.broadcast %4 : vector<1x128xf32> to vector<136x128xf32>
    %6 = arith.addf %3, %5 : vector<136x128xf32>
    %cst_5 = arith.constant 0.000000e+00 : f32
    %7 = vector.broadcast %cst_5 : f32 to vector<136x128xf32>
    %8 = arith.maximumf %6, %7 : vector<136x128xf32>
    %9 = arith.truncf %8 : vector<136x128xf32> to vector<136x128xbf16>
    %c0_6 = arith.constant 0 : index
    %c0_7 = arith.constant 0 : index
    %10 = vector.load %arg3[%c0_6, %c0_7] : memref<128x128xbf16, #tpu.memory_space<vmem>>, vector<128x128xbf16>
    %cst_8 = arith.constant dense<0.000000e+00> : vector<136x128xf32>
    %11 = tpu.matmul %9, %10, %cst_8 {dimension_numbers = #tpu.dot_dimension_numbers<[1], [0], [0], [1], [0, 0, 1, 1], [], []>} : vector<136x128xbf16>, vector<128x128xbf16>, vector<136x128xf32> -> vector<136x128xf32>
    %c1 = arith.constant 1 : index
    %c0_9 = arith.constant 0 : index
    %12 = vector.load %arg5[%c1, %c0_9] : memref<3x128xf32, #tpu.memory_space<vmem>>, vector<1x128xf32>
    %13 = vector.broadcast %12 : vector<1x128xf32> to vector<136x128xf32>
    %14 = arith.addf %11, %13 : vector<136x128xf32>
    %cst_10 = arith.constant 0.000000e+00 : f32
    %15 = vector.broadcast %cst_10 : f32 to vector<136x128xf32>
    %16 = arith.maximumf %14, %15 : vector<136x128xf32>
    %17 = arith.truncf %16 : vector<136x128xf32> to vector<136x128xbf16>
    %c0_11 = arith.constant 0 : index
    %c0_12 = arith.constant 0 : index
    %18 = vector.load %arg4[%c0_11, %c0_12] : memref<128x128xbf16, #tpu.memory_space<vmem>>, vector<128x128xbf16>
    %cst_13 = arith.constant dense<0.000000e+00> : vector<136x128xf32>
    %19 = tpu.matmul %17, %18, %cst_13 {dimension_numbers = #tpu.dot_dimension_numbers<[1], [0], [0], [1], [0, 0, 1, 1], [], []>} : vector<136x128xbf16>, vector<128x128xbf16>, vector<136x128xf32> -> vector<136x128xf32>
    %c2 = arith.constant 2 : index
    %c0_14 = arith.constant 0 : index
    %20 = vector.load %arg5[%c2, %c0_14] : memref<3x128xf32, #tpu.memory_space<vmem>>, vector<1x128xf32>
    %21 = vector.broadcast %20 : vector<1x128xf32> to vector<136x128xf32>
    %22 = arith.addf %19, %21 : vector<136x128xf32>
    %c0_15 = arith.constant 0 : index
    %c0_16 = arith.constant 0 : index
    %23 = vector.load %arg6[%c0_15, %c0_16] : memref<136x128xf32, #tpu.memory_space<vmem>>, vector<136x128xf32>
    tpu.vector_store %arg6[%c0_15, %c0_16], %22 {strides = array<i32>} : memref<136x128xf32, #tpu.memory_space<vmem>>, vector<136x128xf32>,
    return
  }
  func.func @transform_0(%arg0: i32) -> (i32, i32) {
    %c0_i32 = arith.constant 0 : i32
    %c0_i32_0 = arith.constant 0 : i32
    return %arg0, %c0_i32 : i32, i32
  }
  func.func @transform_1(%arg0: i32) -> (i32, i32) {
    %c0_i32 = arith.constant 0 : i32
    %c0_i32_0 = arith.constant 0 : i32
    %c0_i32_1 = arith.constant 0 : i32
    return %c0_i32, %c0_i32_0 : i32, i32
  }
  func.func @transform_2(%arg0: i32) -> (i32, i32) {
    %c0_i32 = arith.constant 0 : i32
    %c0_i32_0 = arith.constant 0 : i32
    %c0_i32_1 = arith.constant 0 : i32
    return %c0_i32, %c0_i32_0 : i32, i32
  }
  func.func @transform_3(%arg0: i32) -> (i32, i32) {
    %c0_i32 = arith.constant 0 : i32
    %c0_i32_0 = arith.constant 0 : i32
    %c0_i32_1 = arith.constant 0 : i32
    return %c0_i32, %c0_i32_0 : i32, i32
  }
  func.func @transform_4(%arg0: i32) -> (i32, i32) {
    %c0_i32 = arith.constant 0 : i32
    %c0_i32_0 = arith.constant 0 : i32
    %c0_i32_1 = arith.constant 0 : i32
    return %c0_i32, %c0_i32_0 : i32, i32
  }
  func.func @transform_5(%arg0: i32) -> (i32, i32) {
    %c0_i32 = arith.constant 0 : i32
    %c0_i32_0 = arith.constant 0 : i32
    return %arg0, %c0_i32 : i32, i32
  }
}

</mosaic_0001>

<llo_original>
// kernel: tpu_custom_call.1
$region0: #{tpu_custom_call.1}
  #allocation0 [shape = 'u32[]', space=smem, size = 0x4, offset = 0x4, fixed_abs, tag = 'smem constant byte address 0x4 - core index']
  #allocation1 [shape = 'u32[144,128]{1,0:T(1,128)}', space=vmem, size = 0x12000, scoped, tag = 'internal scratch']
  %s0 = inlined_call_operand.vmem [shape: f32[260,16], index: 0, kind: input, shape index: {}]
  %s1 = inlined_call_operand.vmem [shape: bf16[16,128], index: 1, kind: input, shape index: {}]
  %s2 = inlined_call_operand.vmem [shape: bf16[128,128], index: 2, kind: input, shape index: {}]
  %s3 = inlined_call_operand.vmem [shape: bf16[128,128], index: 3, kind: input, shape index: {}]
  %s4 = inlined_call_operand.vmem [shape: f32[3,128], index: 4, kind: input, shape index: {}]
  %s5 = inlined_call_operand.hbm [shape: f32[260,128], index: 5, kind: output, shape index: {}]
  %s6 = sld [smem:[#allocation0]]
  $region53: #{tpu_custom_call.1} parent=0
    _
  %s8 = ssub.s32 1, %s6
  %s9 = scalar_select 0, %s8, %s6
  $region1: #{tpu_custom_call.1} parent=0
    #allocation2 [shape = 'u8[139264]{0}', space=vmem, size = 0x22000, scoped, tag = 'output window, operand 0']
    #allocation3 [shape = 's32[2]{0}', space=sflag, size = 0x8, scoped, tag = 'scoped memory for tpu_custom_call.1']
    %10 = vsyncpa [#allocation3], 0
    %s11 = scalar_lea.sflag [#allocation3], 1
    %12 = vsyncpa %s11, 0
    loop: start=0, step=1, limit=4
    $region2: #{tpu_custom_call.1} parent=1 // loop_pre_header
      _
    $region3: #{tpu_custom_call.1} parent=1 // loop_header
      %s14 = sphi 0, %s18
      %p15 = scmp.ge.s32.totalorder %s14, 4
      %s24 = sphi 0, %s26
      %s27 = sphi 0, %s24
      %s28 = sphi 0, %s27
      %s44 = sphi 0, %s28
      %s48 = sphi 0, %s48
      %s50 = sphi 0, %s48
      %s51 = sphi 0, %s50
      %s65 = sphi 0, %s51
      %s69 = sphi 0, %s69
      %s71 = sphi 0, %s69
      %s72 = sphi 0, %s71
      %s86 = sphi 0, %s72
      %s90 = sphi 0, %s90
      %s92 = sphi 0, %s90
      %s93 = sphi 0, %s92
      %s107 = sphi 0, %s93
      %s111 = sphi 0, %s111
      %s113 = sphi 0, %s111
      %s114 = sphi 0, %s113
      %s128 = sphi 0, %s114
      %s134 = sphi 0, %s136
      %s137 = sphi 0, %s134
      %s138 = sphi 0, %s137
      %s154 = sphi 0, %s138
    $region4: #{tpu_custom_call.1} parent=1 // loop_header_branch
      %17 = sbr.rel (%p15) target = $region8
    $region5: #{tpu_custom_call.1} parent=1 // loop_body
      %s19 = ssub.s32 %s14, 1
      %s20 = ssub.s32 %s14, 2
      %s21 = sadd.s32 %s14, 1
      %s22 = ssub.s32 %s14, %s21
      %p23 = scmp.eq.s32.totalorder %s22, 0
      %s25 = sadd.s32 %s24, 1
      %s26 = scalar_select %p23, %s24, %s25
      %p29 = pneg %p23
      %p30 = scmp.eq.s32.totalorder %s14, 1
      %p31 = por %p29, %p30
      %p32 = scmp.ne.s32.totalorder %s24, %s27
      %p33 = scmp.eq.s32.totalorder %s14, 0
      %p34 = por %p32, %p33
      %p35 = scmp.ne.s32.totalorder %s24, %s27
      %p36 = scmp.eq.s32.totalorder %s19, 1
      %p37 = por %p35, %p36
      %p38 = scmp.ne.s32.totalorder %s27, %s28
      %p39 = scmp.eq.s32.totalorder %s19, 0
      %p40 = por %p38, %p39
      %p41 = scmp.ne.s32.totalorder %s27, %s28
      %p42 = scmp.eq.s32.totalorder %s20, 1
      %p43 = por %p41, %p42
      %p45 = scmp.ne.s32.totalorder %s28, %s44
      %p46 = scmp.eq.s32.totalorder %s20, 0
      %p47 = por %p45, %p46
      %s49 = sadd.s32 %s48, 1
      %p52 = scmp.eq.s32.totalorder %s14, 1
      %p53 = scmp.ne.s32.totalorder %s48, %s50
      %p54 = scmp.eq.s32.totalorder %s14, 0
      %p55 = por %p53, %p54
      %p56 = scmp.ne.s32.totalorder %s48, %s50
      %p57 = scmp.eq.s32.totalorder %s19, 1
      %p58 = por %p56, %p57
      %p59 = scmp.ne.s32.totalorder %s50, %s51
      %p60 = scmp.eq.s32.totalorder %s19, 0
      %p61 = por %p59, %p60
      %p62 = scmp.ne.s32.totalorder %s50, %s51
      %p63 = scmp.eq.s32.totalorder %s20, 1
      %p64 = por %p62, %p63
      %p66 = scmp.ne.s32.totalorder %s51, %s65
      %p67 = scmp.eq.s32.totalorder %s20, 0
      %p68 = por %p66, %p67
      %s70 = sadd.s32 %s69, 1
      %p73 = scmp.eq.s32.totalorder %s14, 1
      %p74 = scmp.ne.s32.totalorder %s69, %s71
      %p75 = scmp.eq.s32.totalorder %s14, 0
      %p76 = por %p74, %p75
      %p77 = scmp.ne.s32.totalorder %s69, %s71
      %p78 = scmp.eq.s32.totalorder %s19, 1
      %p79 = por %p77, %p78
      %p80 = scmp.ne.s32.totalorder %s71, %s72
      %p81 = scmp.eq.s32.totalorder %s19, 0
      %p82 = por %p80, %p81
      %p83 = scmp.ne.s32.totalorder %s71, %s72
      %p84 = scmp.eq.s32.totalorder %s20, 1
      %p85 = por %p83, %p84
      %p87 = scmp.ne.s32.totalorder %s72, %s86
      %p88 = scmp.eq.s32.totalorder %s20, 0
      %p89 = por %p87, %p88
      %s91 = sadd.s32 %s90, 1
      %p94 = scmp.eq.s32.totalorder %s14, 1
      %p95 = scmp.ne.s32.totalorder %s90, %s92
      %p96 = scmp.eq.s32.totalorder %s14, 0
      %p97 = por %p95, %p96
      %p98 = scmp.ne.s32.totalorder %s90, %s92
      %p99 = scmp.eq.s32.totalorder %s19, 1
      %p100 = por %p98, %p99
      %p101 = scmp.ne.s32.totalorder %s92, %s93
      %p102 = scmp.eq.s32.totalorder %s19, 0
      %p103 = por %p101, %p102
      %p104 = scmp.ne.s32.totalorder %s92, %s93
      %p105 = scmp.eq.s32.totalorder %s20, 1
      %p106 = por %p104, %p105
      %p108 = scmp.ne.s32.totalorder %s93, %s107
      %p109 = scmp.eq.s32.totalorder %s20, 0
      %p110 = por %p108, %p109
      %s112 = sadd.s32 %s111, 1
      %p115 = scmp.eq.s32.totalorder %s14, 1
      %p116 = scmp.ne.s32.totalorder %s111, %s113
      %p117 = scmp.eq.s32.totalorder %s14, 0
      %p118 = por %p116, %p117
      %p119 = scmp.ne.s32.totalorder %s111, %s113
      %p120 = scmp.eq.s32.totalorder %s19, 1
      %p121 = por %p119, %p120
      %p122 = scmp.ne.s32.totalorder %s113, %s114
      %p123 = scmp.eq.s32.totalorder %s19, 0
      %p124 = por %p122, %p123
      %p125 = scmp.ne.s32.totalorder %s113, %s114
      %p126 = scmp.eq.s32.totalorder %s20, 1
      %p127 = por %p125, %p126
      %p129 = scmp.ne.s32.totalorder %s114, %s128
      %p130 = scmp.eq.s32.totalorder %s20, 0
      %p131 = por %p129, %p130
      %s132 = ssub.s32 %s14, %s21
      %p133 = scmp.eq.s32.totalorder %s132, 0
      %s135 = sadd.s32 %s134, 1
      %s136 = scalar_select %p133, %s134, %s135
      %p139 = pneg %p133
      %p140 = scmp.eq.s32.totalorder %s14, 1
      %p141 = por %p139, %p140
      %p142 = scmp.ne.s32.totalorder %s134, %s137
      %p143 = scmp.eq.s32.totalorder %s14, 0
      %p144 = por %p142, %p143
      %p145 = scmp.ne.s32.totalorder %s134, %s137
      %p146 = scmp.eq.s32.totalorder %s19, 1
      %p147 = por %p145, %p146
      %p148 = scmp.ne.s32.totalorder %s137, %s138
      %p149 = scmp.eq.s32.totalorder %s19, 0
      %p150 = por %p148, %p149
      %p151 = scmp.ne.s32.totalorder %s137, %s138
      %p152 = scmp.eq.s32.totalorder %s20, 1
      %p153 = por %p151, %p152
      %p155 = scmp.ne.s32.totalorder %s138, %s154
      %p156 = scmp.eq.s32.totalorder %s20, 0
      %p157 = por %p155, %p156
      %p158 = scmp.le.s32.totalorder 1, %s14
      %p159 = scmp.lt.s32.totalorder %s14, 3
      %p160 = pnand %p158, %p159
      %p161 = pneg %p160
      // Predicated region
      $region9: #{tpu_custom_call.1} parent=5 // pred_check
        _
      $region10: #{tpu_custom_call.1} parent=5 // pred_check_branch
        %163 = sbr.rel (%p160) target = $region12
      $region11: #{tpu_custom_call.1} parent=5 // pred_region
        %s164 = ssub.s32 %s14, 1
        // Predicated region
        $region13: #{tpu_custom_call.1} parent=11 // pred_check
          %p165 = pneg %p61
        $region14: #{tpu_custom_call.1} parent=11 // pred_check_branch
          %167 = sbr.rel (%p165) target = $region16
        $region15: #{tpu_custom_call.1} parent=11 // pred_region
          _
        $region16: #{tpu_custom_call.1} parent=11 // pred_fallthru
          _
        // Predicated region
        $region17: #{tpu_custom_call.1} parent=11 // pred_check
          %p168 = pneg %p82
        $region18: #{tpu_custom_call.1} parent=11 // pred_check_branch
          %170 = sbr.rel (%p168) target = $region20
        $region19: #{tpu_custom_call.1} parent=11 // pred_region
          _
        $region20: #{tpu_custom_call.1} parent=11 // pred_fallthru
          _
        // Predicated region
        $region21: #{tpu_custom_call.1} parent=11 // pred_check
          %p171 = pneg %p103
        $region22: #{tpu_custom_call.1} parent=11 // pred_check_branch
          %173 = sbr.rel (%p171) target = $region24
        $region23: #{tpu_custom_call.1} parent=11 // pred_region
          _
        $region24: #{tpu_custom_call.1} parent=11 // pred_fallthru
          _
        // Predicated region
        $region25: #{tpu_custom_call.1} parent=11 // pred_check
          %p174 = pneg %p124
        $region26: #{tpu_custom_call.1} parent=11 // pred_check_branch
          %176 = sbr.rel (%p174) target = $region28
        $region27: #{tpu_custom_call.1} parent=11 // pred_region
          _
        $region28: #{tpu_custom_call.1} parent=11 // pred_fallthru
          _
      $region12: #{tpu_custom_call.1} parent=5 // pred_fallthru
        _
      %p177 = scmp.lt.s32.totalorder %s14, 2
      // Predicated region
      $region29: #{tpu_custom_call.1} parent=5 // pred_check
        %p178 = pneg %p177
      $region30: #{tpu_custom_call.1} parent=5 // pred_check_branch
        %180 = sbr.rel (%p178) target = $region32
      $region31: #{tpu_custom_call.1} parent=5 // pred_region
        // Predicated region
        $region33: #{tpu_custom_call.1} parent=31 // pred_check
          %p181 = pneg %p34
        $region34: #{tpu_custom_call.1} parent=31 // pred_check_branch
          %183 = sbr.rel (%p181) target = $region36
        $region35: #{tpu_custom_call.1} parent=31 // pred_region
          %s184 = smul.u32 17, %s14
          %s185 = ssub.s32 33, %s184
          %p186 = scmp.lt.s32.totalorder %s185, 17
          %s187 = scalar_select %p186, %s185, 17
          %s188 = smul.u32 128, %s187
          %p189 = scmp.lt.s32.totalorder %s184, 32
          %s190 = scalar_select %p189, %s184, 32
          %s191 = smul.addr %s190, 8
          %s192 = scalar_lea.vmem %s0, %s191
          %s193 = smul.u32 17, %s14
          %s194 = ssub.s32 33, %s193
          %p195 = scmp.lt.s32.totalorder %s194, 17
          %s196 = scalar_select %p195, %s194, 17
          %s197 = smul.u32 128, %s196
        $region36: #{tpu_custom_call.1} parent=31 // pred_fallthru
          _
      $region32: #{tpu_custom_call.1} parent=5 // pred_fallthru
        _
      %p198 = scmp.le.s32.totalorder 1, %s14
      %p199 = scmp.lt.s32.totalorder %s14, 3
      %p200 = pnand %p198, %p199
      %p201 = pneg %p200
      // Predicated region
      $region37: #{tpu_custom_call.1} parent=5 // pred_check
        _
      $region38: #{tpu_custom_call.1} parent=5 // pred_check_branch
        %203 = sbr.rel (%p200) target = $region40
      $region39: #{tpu_custom_call.1} parent=5 // pred_region
        %s204 = ssub.s32 %s14, 1
        %s205 = smul.u32 17, %s19
        %s206 = ssub.s32 33, %s205
        %p207 = scmp.lt.s32.totalorder %s206, 17
        %s208 = scalar_select %p207, %s206, 17
        %s209 = smul.u32 128, %s208
        %p210 = scmp.lt.s32.totalorder %s205, 32
        %s211 = scalar_select %p210, %s205, 32
        %s212 = smul.addr %s211, 8
        %s213 = scalar_lea.vmem %s0, %s212
        %p214 = pneg %p40
        %p215 = pneg %p37
        %p216 = pneg %p61
        %p217 = pneg %p58
        %p218 = pneg %p82
        %p219 = pneg %p79
        %p220 = pneg %p103
        %p221 = pneg %p100
        %p222 = pneg %p124
        %p223 = pneg %p121
        %p224 = pneg %p150
        %p225 = pneg %p147
        %s226 = sand.u32 %s137, 1
        %s227 = scalar_lea.sflag [#allocation3], %s226
        %s228 = sand.u32 %s137, 1
        %s229 = smul.addr %s228, 136
        %s230 = scalar_lea.vmem [#allocation2], %s229
        %s231 = smul.u32 17, %s19
        %s232 = ssub.s32 33, %s231
        %p233 = scmp.lt.s32.totalorder %s232, 17
        %s234 = scalar_select %p233, %s232, 17
        %s235 = smul.u32 128, %s234
        %p236 = scmp.lt.s32.totalorder %s231, 32
        %s237 = scalar_select %p236, %s231, 32
        %s238 = smul.addr %s237, 8
        %s239 = scalar_lea.vmem %s0, %s238
        %s240 = smul.u32 17, %s19
        %s241 = ssub.s32 33, %s240
        %p242 = scmp.lt.s32.totalorder %s241, 17
        %s243 = scalar_select %p242, %s241, 17
        %s244 = smul.u32 128, %s243
        %s245 = smul.u32 17, %s19
        %s246 = ssub.s32 33, %s245
        %p247 = scmp.lt.s32.totalorder %s246, 17
        %s248 = scalar_select %p247, %s246, 17
        %s249 = smul.u32 128, %s248
        %v251 = vld [vmem:[%s239] sm:$0xff]
        %v252 = vld [vmem:[%s239 + $0x8] sm:$0xff]
        %v253 = vld [vmem:[%s239 + $0x10] sm:$0xff]
        %v254 = vld [vmem:[%s239 + $0x18] sm:$0xff]
        %v255 = vld [vmem:[%s239 + $0x20] sm:$0xff]
        %v256 = vld [vmem:[%s239 + $0x28] sm:$0xff]
        %v257 = vld [vmem:[%s239 + $0x30] sm:$0xff]
        %v258 = vld [vmem:[%s239 + $0x38] sm:$0xff]
        %v259 = vld [vmem:[%s239 + $0x40] sm:$0xff]
        %v260 = vld [vmem:[%s239 + $0x48] sm:$0xff]
        %v261 = vld [vmem:[%s239 + $0x50] sm:$0xff]
        %v262 = vld [vmem:[%s239 + $0x58] sm:$0xff]
        %v263 = vld [vmem:[%s239 + $0x60] sm:$0xff]
        %v264 = vld [vmem:[%s239 + $0x68] sm:$0xff]
        %v265 = vld [vmem:[%s239 + $0x70] sm:$0xff]
        %v266 = vld [vmem:[%s239 + $0x78] sm:$0xff]
        %v267 = vld [vmem:[%s239 + $0x80] sm:$0xff]
        %v268 = vpack.c.bf16 %v252, %v251
        %v269 = vpack.c.bf16 %v254, %v253
        %v270 = vpack.c.bf16 %v256, %v255
        %v271 = vpack.c.bf16 %v258, %v257
        %v272 = vpack.c.bf16 %v260, %v259
        %v273 = vpack.c.bf16 %v262, %v261
        %v274 = vpack.c.bf16 %v264, %v263
        %v275 = vpack.c.bf16 %v266, %v265
        %v276 = vpack.c.bf16 %v267, %v267
        %v277 = vld [vmem:[%s1] sm:$0xf]
        %v278 = vld [vmem:[%s1 + $0x4] sm:$0xf]
        %v279 = vld [vmem:[%s4] sm:$0x1]
        %v280 = vlaneseq
        %v281 = vshrl.u32 %v280, 7
        %v282 = vsub.s32 0, %v281
        %v283 = vrot.slane %v279, %v282
        %v286 = vunpack.c.l.b16 %v277
        %v287 = vunpack.c.l.b16 %v278
        %v288 = vpack.c.b16 %v287, %v286
        %vm290 = vcmask 130048
        %v292 = vsel %vm290, %v268, 0
        %v295 = vsel %vm290, %v269, 0
        %v298 = vsel %vm290, %v270, 0
        %v301 = vsel %vm290, %v271, 0
        %v304 = vsel %vm290, %v272, 0
        %v307 = vsel %vm290, %v273, 0
        %v310 = vsel %vm290, %v274, 0
        %v313 = vsel %vm290, %v275, 0
        %v316 = vsel %vm290, %v276, 0
        %318 = vmatprep.subr.bf16.mxu0 0
        %319 = vmatpush1.bf16.msra.mxu0 %v288
        %320 = vmatprep.subr.bf16.mxu0 0
        %321 = vmatpush1.bf16.msra.mxu0 0
        %322 = vmatprep.subr.bf16.mxu0 0
        %323 = vmatpush1.bf16.msra.mxu0 0
        %324 = vmatprep.subr.bf16.mxu0 0
        %325 = vmatpush1.bf16.msra.mxu0 0
        %326 = vmatprep.subr.bf16.mxu0 0
        %327 = vmatpush1.bf16.msra.mxu0 0
        %328 = vmatprep.subr.bf16.mxu0 0
        %329 = vmatpush1.bf16.msra.mxu0 0
        %330 = vmatprep.subr.bf16.mxu0 0
        %331 = vmatpush1.bf16.msra.mxu0 0
        %332 = vmatprep.subr.bf16.mxu0 0
        %333 = vmatpush1.bf16.msra.mxu0 0
        %334 = vmatprep.subr.bf16.mxu0 0
        %335 = vmatpush1.bf16.msra.mxu0 0
        %336 = vmatprep.subr.bf16.mxu0 0
        %337 = vmatpush1.bf16.msra.mxu0 0
        %338 = vmatprep.subr.bf16.mxu0 0
        %339 = vmatpush1.bf16.msra.mxu0 0
        %340 = vmatprep.subr.bf16.mxu0 0
        %341 = vmatpush1.bf16.msra.mxu0 0
        %342 = vmatprep.subr.bf16.mxu0 0
        %343 = vmatpush1.bf16.msra.mxu0 0
        %344 = vmatprep.subr.bf16.mxu0 0
        %345 = vmatpush1.bf16.msra.mxu0 0
        %346 = vmatprep.subr.bf16.mxu0 0
        %347 = vmatpush1.bf16.msra.mxu0 0
        %348 = vmatprep.subr.bf16.mxu0 0
        %349 = vmatpush1.bf16.msra.mxu0 0
        %350 = vmatprep.mubr.bf16.mxu0 0
        %351 = vmatmul.mubr.bf16.gmra.mrb[0].mxu0 %v292
        %v352 = vpop.f32.mrb[0].mxu0
        %v353 = vadd.f32 %v283, %v352
        %v354 = vpop.f32.mrb[0].mxu0
        %v355 = vpop.f32.mrb[0].mxu0
        %v356 = vadd.f32 %v283, %v355
        %v357 = vpop.f32.mrb[0].mxu0
        %358 = vmatprep.mubr.bf16.mxu0 0
        %359 = vmatmul.mubr.bf16.gmra.mrb[0].mxu0 %v295
        %v360 = vpop.f32.mrb[0].mxu0
        %v361 = vadd.f32 %v283, %v360
        %v362 = vpop.f32.mrb[0].mxu0
        %v363 = vpop.f32.mrb[0].mxu0
        %v364 = vadd.f32 %v283, %v363
        %v365 = vpop.f32.mrb[0].mxu0
        %366 = vmatprep.mubr.bf16.mxu0 0
        %367 = vmatmul.mubr.bf16.gmra.mrb[0].mxu0 %v298
        %v368 = vpop.f32.mrb[0].mxu0
        %v369 = vadd.f32 %v283, %v368
        %v370 = vpop.f32.mrb[0].mxu0
        %v371 = vpop.f32.mrb[0].mxu0
        %v372 = vadd.f32 %v283, %v371
        %v373 = vpop.f32.mrb[0].mxu0
        %374 = vmatprep.mubr.bf16.mxu0 0
        %375 = vmatmul.mubr.bf16.gmra.mrb[0].mxu0 %v301
        %v376 = vpop.f32.mrb[0].mxu0
        %v377 = vadd.f32 %v283, %v376
        %v378 = vpop.f32.mrb[0].mxu0
        %v379 = vpop.f32.mrb[0].mxu0
        %v380 = vadd.f32 %v283, %v379
        %v381 = vpop.f32.mrb[0].mxu0
        %382 = vmatprep.mubr.bf16.mxu0 0
        %383 = vmatmul.mubr.bf16.gmra.mrb[0].mxu0 %v304
        %v384 = vpop.f32.mrb[0].mxu0
        %v385 = vadd.f32 %v283, %v384
        %v386 = vpop.f32.mrb[0].mxu0
        %v387 = vpop.f32.mrb[0].mxu0
        %v388 = vadd.f32 %v283, %v387
        %v389 = vpop.f32.mrb[0].mxu0
        %390 = vmatprep.mubr.bf16.mxu0 0
        %391 = vmatmul.mubr.bf16.gmra.mrb[0].mxu0 %v307
        %v392 = vpop.f32.mrb[0].mxu0
        %v393 = vadd.f32 %v283, %v392
        %v394 = vpop.f32.mrb[0].mxu0
        %v395 = vpop.f32.mrb[0].mxu0
        %v396 = vadd.f32 %v283, %v395
        %v397 = vpop.f32.mrb[0].mxu0
        %398 = vmatprep.mubr.bf16.mxu0 0
        %399 = vmatmul.mubr.bf16.gmra.mrb[0].mxu0 %v310
        %v400 = vpop.f32.mrb[0].mxu0
        %v401 = vadd.f32 %v283, %v400
        %v402 = vpop.f32.mrb[0].mxu0
        %v403 = vpop.f32.mrb[0].mxu0
        %v404 = vadd.f32 %v283, %v403
        %v405 = vpop.f32.mrb[0].mxu0
        %406 = vmatprep.mubr.bf16.mxu0 0
        %407 = vmatmul.mubr.bf16.gmra.mrb[0].mxu0 %v313
        %v408 = vpop.f32.mrb[0].mxu0
        %v409 = vadd.f32 %v283, %v408
        %v410 = vpop.f32.mrb[0].mxu0
        %v411 = vpop.f32.mrb[0].mxu0
        %v412 = vadd.f32 %v283, %v411
        %v413 = vpop.f32.mrb[0].mxu0
        %414 = vmatprep.mubr.bf16.mxu0 0
        %415 = vmatmul.mubr.bf16.gmra.mrb[0].mxu0 %v316
        %v416 = vpop.f32.mrb[0].mxu0
        %v417 = vadd.f32 %v283, %v416
        %v418 = vpop.f32.mrb[0].mxu0
        %v419 = vpop.f32.mrb[0].mxu0
        %v420 = vpop.f32.mrb[0].mxu0
        %421 = vdwg.mxu0
        %v422 = vmax.f32 %v353, 0.0
        %v423 = vmax.f32 %v356, 0.0
        %v424 = vmax.f32 %v361, 0.0
        %v425 = vmax.f32 %v364, 0.0
        %v426 = vmax.f32 %v369, 0.0
        %v427 = vmax.f32 %v372, 0.0
        %v428 = vmax.f32 %v377, 0.0
        %v429 = vmax.f32 %v380, 0.0
        %v430 = vmax.f32 %v385, 0.0
        %v431 = vmax.f32 %v388, 0.0
        %v432 = vmax.f32 %v393, 0.0
        %v433 = vmax.f32 %v396, 0.0
        %v434 = vmax.f32 %v401, 0.0
        %v435 = vmax.f32 %v404, 0.0
        %v436 = vmax.f32 %v409, 0.0
        %v437 = vmax.f32 %v412, 0.0
        %v438 = vmax.f32 %v417, 0.0
        %v439 = vpack.c.bf16 %v423, %v422
        %v440 = vpack.c.bf16 %v425, %v424
        %v441 = vpack.c.bf16 %v427, %v426
        %v442 = vpack.c.bf16 %v429, %v428
        %v443 = vpack.c.bf16 %v431, %v430
        %v444 = vpack.c.bf16 %v433, %v432
        %v445 = vpack.c.bf16 %v435, %v434
        %v446 = vpack.c.bf16 %v437, %v436
        %v447 = vpack.c.bf16 %v438, %v438
        %v448 = vld [vmem:[%s2] sm:$0xf]
        %v449 = vld [vmem:[%s2 + $0x4] sm:$0xf]
        %v450 = vld [vmem:[%s2 + $0x8] sm:$0xf]
        %v451 = vld [vmem:[%s2 + $0xc] sm:$0xf]
        %v452 = vld [vmem:[%s2 + $0x10] sm:$0xf]
        %v453 = vld [vmem:[%s2 + $0x14] sm:$0xf]
        %v454 = vld [vmem:[%s2 + $0x18] sm:$0xf]
        %v455 = vld [vmem:[%s2 + $0x1c] sm:$0xf]
        %v456 = vld [vmem:[%s2 + $0x20] sm:$0xf]
        %v457 = vld [vmem:[%s2 + $0x24] sm:$0xf]
        %v458 = vld [vmem:[%s2 + $0x28] sm:$0xf]
        %v459 = vld [vmem:[%s2 + $0x2c] sm:$0xf]
        %v460 = vld [vmem:[%s2 + $0x30] sm:$0xf]
        %v461 = vld [vmem:[%s2 + $0x34] sm:$0xf]
        %v462 = vld [vmem:[%s2 + $0x38] sm:$0xf]
        %v463 = vld [vmem:[%s2 + $0x3c] sm:$0xf]
        %v464 = vld [vmem:[%s4 + $0x1] sm:$0x1]
        %v465 = vlaneseq
        %v466 = vshrl.u32 %v465, 7
        %v467 = vsub.s32 0, %v466
        %v468 = vrot.slane %v464, %v467
        %v485 = vunpack.c.l.b16 %v448
        %v486 = vunpack.c.l.b16 %v449
        %v487 = vunpack.c.l.b16 %v450
        %v488 = vunpack.c.l.b16 %v451
        %v489 = vunpack.c.l.b16 %v452
        %v490 = vunpack.c.l.b16 %v453
        %v491 = vunpack.c.l.b16 %v454
        %v492 = vunpack.c.l.b16 %v455
        %v493 = vunpack.c.l.b16 %v456
        %v494 = vunpack.c.l.b16 %v457
        %v495 = vunpack.c.l.b16 %v458
        %v496 = vunpack.c.l.b16 %v459
        %v497 = vunpack.c.l.b16 %v460
        %v498 = vunpack.c.l.b16 %v461
        %v499 = vunpack.c.l.b16 %v462
        %v500 = vunpack.c.l.b16 %v463
        %v501 = vpack.c.b16 %v486, %v485
        %v502 = vpack.c.b16 %v488, %v487
        %v503 = vpack.c.b16 %v490, %v489
        %v504 = vpack.c.b16 %v492, %v491
        %v505 = vpack.c.b16 %v494, %v493
        %v506 = vpack.c.b16 %v496, %v495
        %v507 = vpack.c.b16 %v498, %v497
        %v508 = vpack.c.b16 %v500, %v499
        %517 = vmatprep.subr.bf16.mxu0 0
        %518 = vmatpush1.bf16.msra.mxu0 %v501
        %519 = vmatprep.subr.bf16.mxu0 0
        %520 = vmatpush1.bf16.msra.mxu0 %v502
        %521 = vmatprep.subr.bf16.mxu0 0
        %522 = vmatpush1.bf16.msra.mxu0 %v503
        %523 = vmatprep.subr.bf16.mxu0 0
        %524 = vmatpush1.bf16.msra.mxu0 %v504
        %525 = vmatprep.subr.bf16.mxu0 0
        %526 = vmatpush1.bf16.msra.mxu0 %v505
        %527 = vmatprep.subr.bf16.mxu0 0
        %528 = vmatpush1.bf16.msra.mxu0 %v506
        %529 = vmatprep.subr.bf16.mxu0 0
        %530 = vmatpush1.bf16.msra.mxu0 %v507
        %531 = vmatprep.subr.bf16.mxu0 0
        %532 = vmatpush1.bf16.msra.mxu0 %v508
        %533 = vmatprep.subr.bf16.mxu0 0
        %534 = vmatpush1.bf16.msra.mxu0 0
        %535 = vmatprep.subr.bf16.mxu0 0
        %536 = vmatpush1.bf16.msra.mxu0 0
        %537 = vmatprep.subr.bf16.mxu0 0
        %538 = vmatpush1.bf16.msra.mxu0 0
        %539 = vmatprep.subr.bf16.mxu0 0
        %540 = vmatpush1.bf16.msra.mxu0 0
        %541 = vmatprep.subr.bf16.mxu0 0
        %542 = vmatpush1.bf16.msra.mxu0 0
        %543 = vmatprep.subr.bf16.mxu0 0
        %544 = vmatpush1.bf16.msra.mxu0 0
        %545 = vmatprep.subr.bf16.mxu0 0
        %546 = vmatpush1.bf16.msra.mxu0 0
        %547 = vmatprep.subr.bf16.mxu0 0
        %548 = vmatpush1.bf16.msra.mxu0 0
        %549 = vmatprep.mubr.bf16.mxu0 0
        %550 = vmatmul.mubr.bf16.gmra.mrb[0].mxu0 %v439
        %v551 = vpop.f32.mrb[0].mxu0
        %v552 = vadd.f32 %v468, %v551
        %v553 = vpop.f32.mrb[0].mxu0
        %v554 = vpop.f32.mrb[0].mxu0
        %v555 = vadd.f32 %v468, %v554
        %v556 = vpop.f32.mrb[0].mxu0
        %557 = vmatprep.mubr.bf16.mxu0 0
        %558 = vmatmul.mubr.bf16.gmra.mrb[0].mxu0 %v440
        %v559 = vpop.f32.mrb[0].mxu0
        %v560 = vadd.f32 %v468, %v559
        %v561 = vpop.f32.mrb[0].mxu0
        %v562 = vpop.f32.mrb[0].mxu0
        %v563 = vadd.f32 %v468, %v562
        %v564 = vpop.f32.mrb[0].mxu0
        %565 = vmatprep.mubr.bf16.mxu0 0
        %566 = vmatmul.mubr.bf16.gmra.mrb[0].mxu0 %v441
        %v567 = vpop.f32.mrb[0].mxu0
        %v568 = vadd.f32 %v468, %v567
        %v569 = vpop.f32.mrb[0].mxu0
        %v570 = vpop.f32.mrb[0].mxu0
        %v571 = vadd.f32 %v468, %v570
        %v572 = vpop.f32.mrb[0].mxu0
        %573 = vmatprep.mubr.bf16.mxu0 0
        %574 = vmatmul.mubr.bf16.gmra.mrb[0].mxu0 %v442
        %v575 = vpop.f32.mrb[0].mxu0
        %v576 = vadd.f32 %v468, %v575
        %v577 = vpop.f32.mrb[0].mxu0
        %v578 = vpop.f32.mrb[0].mxu0
        %v579 = vadd.f32 %v468, %v578
        %v580 = vpop.f32.mrb[0].mxu0
        %581 = vmatprep.mubr.bf16.mxu0 0
        %582 = vmatmul.mubr.bf16.gmra.mrb[0].mxu0 %v443
        %v583 = vpop.f32.mrb[0].mxu0
        %v584 = vadd.f32 %v468, %v583
        %v585 = vpop.f32.mrb[0].mxu0
        %v586 = vpop.f32.mrb[0].mxu0
        %v587 = vadd.f32 %v468, %v586
        %v588 = vpop.f32.mrb[0].mxu0
        %589 = vmatprep.mubr.bf16.mxu0 0
        %590 = vmatmul.mubr.bf16.gmra.mrb[0].mxu0 %v444
        %v591 = vpop.f32.mrb[0].mxu0
        %v592 = vadd.f32 %v468, %v591
        %v593 = vpop.f32.mrb[0].mxu0
        %v594 = vpop.f32.mrb[0].mxu0
        %v595 = vadd.f32 %v468, %v594
        %v596 = vpop.f32.mrb[0].mxu0
        %597 = vmatprep.mubr.bf16.mxu0 0
        %598 = vmatmul.mubr.bf16.gmra.mrb[0].mxu0 %v445
        %v599 = vpop.f32.mrb[0].mxu0
        %v600 = vadd.f32 %v468, %v599
        %v601 = vpop.f32.mrb[0].mxu0
        %v602 = vpop.f32.mrb[0].mxu0
        %v603 = vadd.f32 %v468, %v602
        %v604 = vpop.f32.mrb[0].mxu0
        %605 = vmatprep.mubr.bf16.mxu0 0
        %606 = vmatmul.mubr.bf16.gmra.mrb[0].mxu0 %v446
        %v607 = vpop.f32.mrb[0].mxu0
        %v608 = vadd.f32 %v468, %v607
        %v609 = vpop.f32.mrb[0].mxu0
        %v610 = vpop.f32.mrb[0].mxu0
        %v611 = vadd.f32 %v468, %v610
        %v612 = vpop.f32.mrb[0].mxu0
        %613 = vmatprep.mubr.bf16.mxu0 0
        %614 = vmatmul.mubr.bf16.gmra.mrb[0].mxu0 %v447
        %v615 = vpop.f32.mrb[0].mxu0
        %v616 = vadd.f32 %v468, %v615
        %v617 = vpop.f32.mrb[0].mxu0
        %v618 = vpop.f32.mrb[0].mxu0
        %v619 = vpop.f32.mrb[0].mxu0
        %620 = vdwg.mxu0
        %v621 = vmax.f32 %v552, 0.0
        %v622 = vmax.f32 %v555, 0.0
        %v623 = vmax.f32 %v560, 0.0
        %v624 = vmax.f32 %v563, 0.0
        %v625 = vmax.f32 %v568, 0.0
        %v626 = vmax.f32 %v571, 0.0
        %v627 = vmax.f32 %v576, 0.0
        %v628 = vmax.f32 %v579, 0.0
        %v629 = vmax.f32 %v584, 0.0
        %v630 = vmax.f32 %v587, 0.0
        %v631 = vmax.f32 %v592, 0.0
        %v632 = vmax.f32 %v595, 0.0
        %v633 = vmax.f32 %v600, 0.0
        %v634 = vmax.f32 %v603, 0.0
        %v635 = vmax.f32 %v608, 0.0
        %v636 = vmax.f32 %v611, 0.0
        %v637 = vmax.f32 %v616, 0.0
        %v638 = vpack.c.bf16 %v622, %v621
        %v639 = vpack.c.bf16 %v624, %v623
        %v640 = vpack.c.bf16 %v626, %v625
        %v641 = vpack.c.bf16 %v628, %v627
        %v642 = vpack.c.bf16 %v630, %v629
        %v643 = vpack.c.bf16 %v632, %v631
        %v644 = vpack.c.bf16 %v634, %v633
        %v645 = vpack.c.bf16 %v636, %v635
        %v646 = vpack.c.bf16 %v637, %v637
        %v647 = vld [vmem:[%s3] sm:$0xf]
        %v648 = vld [vmem:[%s3 + $0x4] sm:$0xf]
        %v649 = vld [vmem:[%s3 + $0x8] sm:$0xf]
        %v650 = vld [vmem:[%s3 + $0xc] sm:$0xf]
        %v651 = vld [vmem:[%s3 + $0x10] sm:$0xf]
        %v652 = vld [vmem:[%s3 + $0x14] sm:$0xf]
        %v653 = vld [vmem:[%s3 + $0x18] sm:$0xf]
        %v654 = vld [vmem:[%s3 + $0x1c] sm:$0xf]
        %v655 = vld [vmem:[%s3 + $0x20] sm:$0xf]
        %v656 = vld [vmem:[%s3 + $0x24] sm:$0xf]
        %v657 = vld [vmem:[%s3 + $0x28] sm:$0xf]
        %v658 = vld [vmem:[%s3 + $0x2c] sm:$0xf]
        %v659 = vld [vmem:[%s3 + $0x30] sm:$0xf]
        %v660 = vld [vmem:[%s3 + $0x34] sm:$0xf]
        %v661 = vld [vmem:[%s3 + $0x38] sm:$0xf]
        %v662 = vld [vmem:[%s3 + $0x3c] sm:$0xf]
        %v663 = vld [vmem:[%s4 + $0x2] sm:$0x1]
        %v664 = vlaneseq
        %v665 = vshrl.u32 %v664, 7
        %v666 = vsub.s32 0, %v665
        %v667 = vrot.slane %v663, %v666
        %v684 = vunpack.c.l.b16 %v647
        %v685 = vunpack.c.l.b16 %v648
        %v686 = vunpack.c.l.b16 %v649
        %v687 = vunpack.c.l.b16 %v650
        %v688 = vunpack.c.l.b16 %v651
        %v689 = vunpack.c.l.b16 %v652
        %v690 = vunpack.c.l.b16 %v653
        %v691 = vunpack.c.l.b16 %v654
        %v692 = vunpack.c.l.b16 %v655
        %v693 = vunpack.c.l.b16 %v656
        %v694 = vunpack.c.l.b16 %v657
        %v695 = vunpack.c.l.b16 %v658
        %v696 = vunpack.c.l.b16 %v659
        %v697 = vunpack.c.l.b16 %v660
        %v698 = vunpack.c.l.b16 %v661
        %v699 = vunpack.c.l.b16 %v662
        %v700 = vpack.c.b16 %v685, %v684
        %v701 = vpack.c.b16 %v687, %v686
        %v702 = vpack.c.b16 %v689, %v688
        %v703 = vpack.c.b16 %v691, %v690
        %v704 = vpack.c.b16 %v693, %v692
        %v705 = vpack.c.b16 %v695, %v694
        %v706 = vpack.c.b16 %v697, %v696
        %v707 = vpack.c.b16 %v699, %v698
        %716 = vmatprep.subr.bf16.mxu0 0
        %717 = vmatpush1.bf16.msra.mxu0 %v700
        %718 = vmatprep.subr.bf16.mxu0 0
        %719 = vmatpush1.bf16.msra.mxu0 %v701
        %720 = vmatprep.subr.bf16.mxu0 0
        %721 = vmatpush1.bf16.msra.mxu0 %v702
        %722 = vmatprep.subr.bf16.mxu0 0
        %723 = vmatpush1.bf16.msra.mxu0 %v703
        %724 = vmatprep.subr.bf16.mxu0 0
        %725 = vmatpush1.bf16.msra.mxu0 %v704
        %726 = vmatprep.subr.bf16.mxu0 0
        %727 = vmatpush1.bf16.msra.mxu0 %v705
        %728 = vmatprep.subr.bf16.mxu0 0
        %729 = vmatpush1.bf16.msra.mxu0 %v706
        %730 = vmatprep.subr.bf16.mxu0 0
        %731 = vmatpush1.bf16.msra.mxu0 %v707
        %732 = vmatprep.subr.bf16.mxu0 0
        %733 = vmatpush1.bf16.msra.mxu0 0
        %734 = vmatprep.subr.bf16.mxu0 0
        %735 = vmatpush1.bf16.msra.mxu0 0
        %736 = vmatprep.subr.bf16.mxu0 0
        %737 = vmatpush1.bf16.msra.mxu0 0
        %738 = vmatprep.subr.bf16.mxu0 0
        %739 = vmatpush1.bf16.msra.mxu0 0
        %740 = vmatprep.subr.bf16.mxu0 0
        %741 = vmatpush1.bf16.msra.mxu0 0
        %742 = vmatprep.subr.bf16.mxu0 0
        %743 = vmatpush1.bf16.msra.mxu0 0
        %744 = vmatprep.subr.bf16.mxu0 0
        %745 = vmatpush1.bf16.msra.mxu0 0
        %746 = vmatprep.subr.bf16.mxu0 0
        %747 = vmatpush1.bf16.msra.mxu0 0
        %748 = vmatprep.mubr.bf16.mxu0 0
        %749 = vmatmul.mubr.bf16.gmra.mrb[0].mxu0 %v638
        %v750 = vpop.f32.mrb[0].mxu0
        %v751 = vadd.f32 %v667, %v750
        %v752 = vpop.f32.mrb[0].mxu0
        %v753 = vpop.f32.mrb[0].mxu0
        %v754 = vadd.f32 %v667, %v753
        %v755 = vpop.f32.mrb[0].mxu0
        %756 = vmatprep.mubr.bf16.mxu0 0
        %757 = vmatmul.mubr.bf16.gmra.mrb[0].mxu0 %v639
        %v758 = vpop.f32.mrb[0].mxu0
        %v759 = vadd.f32 %v667, %v758
        %v760 = vpop.f32.mrb[0].mxu0
        %v761 = vpop.f32.mrb[0].mxu0
        %v762 = vadd.f32 %v667, %v761
        %v763 = vpop.f32.mrb[0].mxu0
        %764 = vmatprep.mubr.bf16.mxu0 0
        %765 = vmatmul.mubr.bf16.gmra.mrb[0].mxu0 %v640
        %v766 = vpop.f32.mrb[0].mxu0
        %v767 = vadd.f32 %v667, %v766
        %v768 = vpop.f32.mrb[0].mxu0
        %v769 = vpop.f32.mrb[0].mxu0
        %v770 = vadd.f32 %v667, %v769
        %v771 = vpop.f32.mrb[0].mxu0
        %772 = vmatprep.mubr.bf16.mxu0 0
        %773 = vmatmul.mubr.bf16.gmra.mrb[0].mxu0 %v641
        %v774 = vpop.f32.mrb[0].mxu0
        %v775 = vadd.f32 %v667, %v774
        %v776 = vpop.f32.mrb[0].mxu0
        %v777 = vpop.f32.mrb[0].mxu0
        %v778 = vadd.f32 %v667, %v777
        %v779 = vpop.f32.mrb[0].mxu0
        %780 = vmatprep.mubr.bf16.mxu0 0
        %781 = vmatmul.mubr.bf16.gmra.mrb[0].mxu0 %v642
        %v782 = vpop.f32.mrb[0].mxu0
        %v783 = vadd.f32 %v667, %v782
        %v784 = vpop.f32.mrb[0].mxu0
        %v785 = vpop.f32.mrb[0].mxu0
        %v786 = vadd.f32 %v667, %v785
        %v787 = vpop.f32.mrb[0].mxu0
        %788 = vmatprep.mubr.bf16.mxu0 0
        %789 = vmatmul.mubr.bf16.gmra.mrb[0].mxu0 %v643
        %v790 = vpop.f32.mrb[0].mxu0
        %v791 = vadd.f32 %v667, %v790
        %v792 = vpop.f32.mrb[0].mxu0
        %v793 = vpop.f32.mrb[0].mxu0
        %v794 = vadd.f32 %v667, %v793
        %v795 = vpop.f32.mrb[0].mxu0
        %796 = vmatprep.mubr.bf16.mxu0 0
        %797 = vmatmul.mubr.bf16.gmra.mrb[0].mxu0 %v644
        %v798 = vpop.f32.mrb[0].mxu0
        %v799 = vadd.f32 %v667, %v798
        %v800 = vpop.f32.mrb[0].mxu0
        %v801 = vpop.f32.mrb[0].mxu0
        %v802 = vadd.f32 %v667, %v801
        %v803 = vpop.f32.mrb[0].mxu0
        %804 = vmatprep.mubr.bf16.mxu0 0
        %805 = vmatmul.mubr.bf16.gmra.mrb[0].mxu0 %v645
        %v806 = vpop.f32.mrb[0].mxu0
        %v807 = vadd.f32 %v667, %v806
        %v808 = vpop.f32.mrb[0].mxu0
        %v809 = vpop.f32.mrb[0].mxu0
        %v810 = vadd.f32 %v667, %v809
        %v811 = vpop.f32.mrb[0].mxu0
        %812 = vmatprep.mubr.bf16.mxu0 0
        %813 = vmatmul.mubr.bf16.gmra.mrb[0].mxu0 %v646
        %v814 = vpop.f32.mrb[0].mxu0
        %v815 = vadd.f32 %v667, %v814
        %v816 = vpop.f32.mrb[0].mxu0
        %v817 = vpop.f32.mrb[0].mxu0
        %v818 = vpop.f32.mrb[0].mxu0
        %819 = vdwg.mxu0
        %820 = vst [vmem:[%s230] sm:$0xff] %v751
        %821 = vst [vmem:[%s230 + $0x8] sm:$0xff] %v754
        %822 = vst [vmem:[%s230 + $0x10] sm:$0xff] %v759
        %823 = vst [vmem:[%s230 + $0x18] sm:$0xff] %v762
        %824 = vst [vmem:[%s230 + $0x20] sm:$0xff] %v767
        %825 = vst [vmem:[%s230 + $0x28] sm:$0xff] %v770
        %826 = vst [vmem:[%s230 + $0x30] sm:$0xff] %v775
        %827 = vst [vmem:[%s230 + $0x38] sm:$0xff] %v778
        %828 = vst [vmem:[%s230 + $0x40] sm:$0xff] %v783
        %829 = vst [vmem:[%s230 + $0x48] sm:$0xff] %v786
        %830 = vst [vmem:[%s230 + $0x50] sm:$0xff] %v791
        %831 = vst [vmem:[%s230 + $0x58] sm:$0xff] %v794
        %832 = vst [vmem:[%s230 + $0x60] sm:$0xff] %v799
        %833 = vst [vmem:[%s230 + $0x68] sm:$0xff] %v802
        %834 = vst [vmem:[%s230 + $0x70] sm:$0xff] %v807
        %835 = vst [vmem:[%s230 + $0x78] sm:$0xff] %v810
        %836 = vst [vmem:[%s230 + $0x80] sm:$0xff] %v815
        %s837 = sand.u32 %s137, 1
        %s838 = scalar_lea.sflag [#allocation3], %s837
        %s839 = sand.u32 %s137, 1
        %s840 = smul.addr %s839, 136
        %s841 = scalar_lea.vmem [#allocation2], %s840
        // Predicated region
        $region41: #{tpu_custom_call.1} parent=39 // pred_check
          %p842 = pneg %p147
        $region42: #{tpu_custom_call.1} parent=39 // pred_check_branch
          %844 = sbr.rel (%p842) target = $region44
        $region43: #{tpu_custom_call.1} parent=39 // pred_region
          %s845 = smul.u32 17, %s19
          %s846 = ssub.s32 33, %s845
          %p847 = scmp.lt.s32.totalorder %s846, 17
          %s848 = scalar_select %p847, %s846, 17
          %s849 = smul.u32 128, %s848
          %s851 = ssub.s32 2176, %s849
          %852 = vsyncadd %s838, %s851
          %p853 = scmp.ne.s32.totalorder 0, %s849
          %s854 = smul.addr %s845, 128
          %s855 = scalar_lea.hbm %s5, %s854
          %s856 = smul.u32 8, %s848
          %s857 = sshll.u32 %s841, 4
          %s858 = int_to_ptr.vmem [resolvable:$true] %s857
          %s859 = sshll.u32 %s856, 4
          %863 = dma.vmem_to_hbm [thread:$0]  (%p853), %s858, %s859, %s855, %s838, 128, 128, 8
        $region44: #{tpu_custom_call.1} parent=39 // pred_fallthru
          _
      $region40: #{tpu_custom_call.1} parent=5 // pred_fallthru
        _
      %p864 = scmp.le.s32.totalorder 2, %s14
      // Predicated region
      $region45: #{tpu_custom_call.1} parent=5 // pred_check
        %p865 = pneg %p864
      $region46: #{tpu_custom_call.1} parent=5 // pred_check_branch
        %867 = sbr.rel (%p865) target = $region48
      $region47: #{tpu_custom_call.1} parent=5 // pred_region
        %s868 = ssub.s32 %s14, 2
        // Predicated region
        $region49: #{tpu_custom_call.1} parent=47 // pred_check
          %p869 = pneg %p153
        $region50: #{tpu_custom_call.1} parent=47 // pred_check_branch
          %871 = sbr.rel (%p869) target = $region52
        $region51: #{tpu_custom_call.1} parent=47 // pred_region
          %s872 = sand.u32 %s138, 1
          %s873 = scalar_lea.sflag [#allocation3], %s872
          %s874 = sand.u32 %s138, 1
          %s875 = smul.addr %s874, 136
          %s876 = scalar_lea.vmem [#allocation2], %s875
          %877 = dma.done %s873, 2176
        $region52: #{tpu_custom_call.1} parent=47 // pred_fallthru
          _
      $region48: #{tpu_custom_call.1} parent=5 // pred_fallthru
        _
    $region6: #{tpu_custom_call.1} parent=1 // loop_footer
      %s18 = sadd.s32 1, %s14
    $region7: #{tpu_custom_call.1} parent=1 // loop_footer_branch
      %13 = sbr.rel target = $region3
    $region8: #{tpu_custom_call.1} parent=1 // loop_exit
      _
    %878 = vsyncpa [#allocation3], 1
    %s879 = scalar_lea.sflag [#allocation3], 1
    %880 = vsyncpa %s879, 1

</llo_original>
